<compile_context>
chip_gen: v7x
topology: tpu7x:2x2x1
jax: 0.10.0
libtpu: 0.0.40
codegen_flags: <defaults>
</compile_context>

<pallas_src>
import jax
import jax.numpy as jnp
from jax.experimental import pallas as pl
from jax.experimental.pallas import tpu as pltpu


def _mish_kernel(x_ref, o_ref):
    # x_ref / o_ref: (TB, C) tiles in VMEM.
    x = x_ref[...].astype(jnp.float32)

    # Single transcendental: u = exp(-|x|) in (0, 1]; never overflows.
    u = jnp.exp(-jnp.abs(x))
    pos = x >= 0.0
    u2 = u * u

    # tanh(softplus(x)) = num / den, branch-free via select (VALU ops):
    #   x >= 0: num = 1 + 2u,      den = num + 2u^2
    #   x <  0: num = u*(u + 2),   den = num + 2
    num = jnp.where(pos, 1.0 + 2.0 * u, u * (u + 2.0))
    den = num + jnp.where(pos, 2.0 * u2, 2.0)

    # Approx reciprocal on the EUP + two Newton-Raphson steps on the VALU
    # (den is in (1, 5], so this is safe and recovers full f32 accuracy).
    r = pl.reciprocal(den, approx=True)
    r = r * (2.0 - den * r)
    r = r * (2.0 - den * r)

    o_ref[...] = (x * num * r).astype(o_ref.dtype)


def mish(x: jax.Array) -> jax.Array:
    """Elementwise Mish, any input shape / float dtype."""
    orig_shape = x.shape
    orig_dtype = x.dtype
    n = x.size
    itemsize = jnp.dtype(orig_dtype).itemsize

    # Lane-dense column count. Prefer one that divides n exactly so the
    # pad + trailing-slice HBM copies are skipped entirely.
    C = None
    for cand in (1024, 512, 256, 128):
        if n % cand == 0:
            C = cand
            break
    needs_pad = C is None
    if needs_pad:
        C = 512

    rows = pl.cdiv(n, C)

    # ~4 MiB blocks amortize the ~0.35 us/step pipeline overhead; TB is a
    # multiple of 32 so bf16 / int8 / fp8 layouts stay native.
    target_rows = max(32, ((4 << 20) // (C * itemsize)) // 32 * 32)
    if rows <= target_rows:
        TB = rows            # single block == full row extent (always legal)
    else:
        TB = target_rows     # last block may be partial; Pallas masks the edge
    grid = (pl.cdiv(rows, TB),)

    x_flat = x.reshape(-1)
    if needs_pad:
        x_flat = jnp.pad(x_flat, (0, rows * C - n))
    x2d = x_flat.reshape(rows, C)

    cost = pl.CostEstimate(
        flops=12 * rows * C,
        transcendentals=2 * rows * C,          # exp + approx reciprocal
        bytes_accessed=2 * rows * C * itemsize,
    )

    out2d = pl.pallas_call(
        _mish_kernel,
        out_shape=jax.ShapeDtypeStruct((rows, C), orig_dtype),
        grid=grid,
        in_specs=[pl.BlockSpec((TB, C), lambda i: (i, 0))],
        out_specs=pl.BlockSpec((TB, C), lambda i: (i, 0)),
        compiler_params=pltpu.CompilerParams(
            dimension_semantics=("parallel",),
            vmem_limit_bytes=48 * 1024 * 1024,
        ),
        cost_estimate=cost,
    )(x2d)

    out_flat = out2d.reshape(-1)
    if needs_pad:
        out_flat = out_flat[:n]
    return out_flat.reshape(orig_shape)


def _reference(x: jax.Array) -> jax.Array:
    return x * jnp.tanh(jax.nn.softplus(x))


if __name__ == "__main__":
    key = jax.random.PRNGKey(0)
    # Small activation-like tensor: (batch=2, channels=4, 16, 16).
    x = jax.random.normal(key, (2, 4, 16, 16), dtype=jnp.float32) * 3.0

    out = mish(x)
    jax.block_until_ready(out)

    ref = _reference(x)
    assert out.shape == x.shape
    assert out.dtype == x.dtype
    assert jnp.allclose(out, ref, atol=1e-5, rtol=1e-5)

    print("KERNEL_OK")
</pallas_src>

<mosaic_0001>
module attributes {stable_mosaic.version = 11 : i64} {
  func.func @_mish_kernel(%arg0: i32, %arg1: memref<2x1024xf32, #tpu.memory_space<vmem>>, %arg2: memref<2x1024xf32, #tpu.memory_space<vmem>>) attributes {dimension_semantics = [#tpu.dimension_semantics<parallel>], iteration_bounds = array<i64: 1>, scalar_prefetch = 0 : i64, scratch_operands = 0 : i64, tpu.core_type = #tpu.core_type<tc>, window_params = [{transform_indices = @transform_0, window_bounds = array<i64: 2, 1024>}, {transform_indices = @transform_1, window_bounds = array<i64: 2, 1024>}]} {
    %c0 = arith.constant 0 : index
    %c0_0 = arith.constant 0 : index
    %0 = vector.load %arg1[%c0, %c0_0] : memref<2x1024xf32, #tpu.memory_space<vmem>>, vector<2x1024xf32>
    %1 = math.absf %0 : vector<2x1024xf32>
    %cst = arith.constant 0.000000e+00 : f32
    %2 = vector.broadcast %cst : f32 to vector<2x1024xf32>
    %3 = arith.subf %2, %1 : vector<2x1024xf32>
    %4 = math.exp %3 : vector<2x1024xf32>
    %cst_1 = arith.constant 0.000000e+00 : f32
    %5 = vector.broadcast %cst_1 : f32 to vector<2x1024xf32>
    %6 = arith.cmpf oge, %0, %5 : vector<2x1024xf32>
    %7 = arith.mulf %4, %4 : vector<2x1024xf32>
    %cst_2 = arith.constant 2.000000e+00 : f32
    %8 = vector.broadcast %cst_2 : f32 to vector<2x1024xf32>
    %9 = arith.mulf %8, %4 : vector<2x1024xf32>
    %cst_3 = arith.constant 1.000000e+00 : f32
    %10 = vector.broadcast %cst_3 : f32 to vector<2x1024xf32>
    %11 = arith.addf %10, %9 : vector<2x1024xf32>
    %cst_4 = arith.constant 2.000000e+00 : f32
    %12 = vector.broadcast %cst_4 : f32 to vector<2x1024xf32>
    %13 = arith.addf %4, %12 : vector<2x1024xf32>
    %14 = arith.mulf %4, %13 : vector<2x1024xf32>
    %15 = arith.select %6, %11, %14 : vector<2x1024xi1>, vector<2x1024xf32>
    %cst_5 = arith.constant 2.000000e+00 : f32
    %16 = vector.broadcast %cst_5 : f32 to vector<2x1024xf32>
    %17 = arith.mulf %16, %7 : vector<2x1024xf32>
    %cst_6 = arith.constant 2.000000e+00 : f32
    %18 = vector.broadcast %cst_6 : f32 to vector<2x1024xf32>
    %19 = arith.select %6, %17, %18 : vector<2x1024xi1>, vector<2x1024xf32>
    %20 = arith.addf %15, %19 : vector<2x1024xf32>
    %21 = tpu.reciprocal %20 {approx = true} : vector<2x1024xf32> -> vector<2x1024xf32>
    %22 = arith.mulf %20, %21 : vector<2x1024xf32>
    %cst_7 = arith.constant 2.000000e+00 : f32
    %23 = vector.broadcast %cst_7 : f32 to vector<2x1024xf32>
    %24 = arith.subf %23, %22 : vector<2x1024xf32>
    %25 = arith.mulf %21, %24 : vector<2x1024xf32>
    %26 = arith.mulf %20, %25 : vector<2x1024xf32>
    %cst_8 = arith.constant 2.000000e+00 : f32
    %27 = vector.broadcast %cst_8 : f32 to vector<2x1024xf32>
    %28 = arith.subf %27, %26 : vector<2x1024xf32>
    %29 = arith.mulf %25, %28 : vector<2x1024xf32>
    %30 = arith.mulf %0, %15 : vector<2x1024xf32>
    %31 = arith.mulf %30, %29 : vector<2x1024xf32>
    %c0_9 = arith.constant 0 : index
    %c0_10 = arith.constant 0 : index
    %32 = vector.load %arg2[%c0_9, %c0_10] : memref<2x1024xf32, #tpu.memory_space<vmem>>, vector<2x1024xf32>
    tpu.vector_store %arg2[%c0_9, %c0_10], %31 {strides = array<i32>} : memref<2x1024xf32, #tpu.memory_space<vmem>>, vector<2x1024xf32>,
    return
  }
  func.func @transform_0(%arg0: i32) -> (i32, i32) {
    %c0_i32 = arith.constant 0 : i32
    %c0_i32_0 = arith.constant 0 : i32
    return %arg0, %c0_i32 : i32, i32
  }
  func.func @transform_1(%arg0: i32) -> (i32, i32) {
    %c0_i32 = arith.constant 0 : i32
    %c0_i32_0 = arith.constant 0 : i32
    return %arg0, %c0_i32 : i32, i32
  }
}

</mosaic_0001>

<llo_original>
// kernel: tpu_custom_call.1
$region0: #{tpu_custom_call.1}
  #allocation0 [shape = 'u32[]', space=smem, size = 0x4, offset = 0x4, fixed_abs, tag = 'smem constant byte address 0x4 - core index']
  #allocation1 [shape = 'u32[144,128]{1,0:T(1,128)}', space=vmem, size = 0x12000, scoped, tag = 'internal scratch']
  %s0 = inlined_call_operand.hbm [shape: f32[2,1024], index: 0, kind: input, shape index: {}]
  %s1 = inlined_call_operand.hbm [shape: f32[2,1024], index: 1, kind: output, shape index: {}]
  %s2 = sld [smem:[#allocation0]]
  $region18: #{tpu_custom_call.1} parent=0
    _
  %s4 = ssub.s32 1, %s2
  %s5 = scalar_select 0, %s4, %s2
  $region1: #{tpu_custom_call.1} parent=0
    #allocation2 [shape = 'u8[8192]{0}', space=vmem, size = 0x2000, scoped, tag = 'input window, operand 0, single buffered']
    #allocation3 [shape = 's32[1]{0}', space=sflag, size = 0x4, scoped, tag = 'scoped memory for tpu_custom_call.1']
    #allocation4 [shape = 's32[1]{0}', space=sflag, size = 0x4, scoped, tag = 'scoped memory for tpu_custom_call.1']
    #allocation5 [shape = 'u8[8192]{0}', space=vmem, size = 0x2000, scoped, tag = 'output window, operand 0, single buffered']
    %6 = vsyncpa [#allocation3], 0
    %7 = vsyncpa [#allocation4], 0
    // Predicated region
    $region2: #{tpu_custom_call.1} parent=1 // pred_check
      _
    $region3: #{tpu_custom_call.1} parent=1 // pred_check_branch
      %9 = sbr.rel (0) target = $region5
    $region4: #{tpu_custom_call.1} parent=1 // pred_region
      %s11 = ssub.s32 256, 256
      %12 = vsyncadd [#allocation3], %s11
      %s14 = sshll.u32 [#allocation2], 4
      %s15 = int_to_ptr.vmem [resolvable:$true] %s14
      %17 = dma.hbm_to_vmem [thread:$0]  %s0, 256, %s15, [#allocation3]
    $region5: #{tpu_custom_call.1} parent=1 // pred_fallthru
      _
    // Predicated region
    $region6: #{tpu_custom_call.1} parent=1 // pred_check
      _
    $region7: #{tpu_custom_call.1} parent=1 // pred_check_branch
      %19 = sbr.rel (0) target = $region9
    $region8: #{tpu_custom_call.1} parent=1 // pred_region
      %20 = dma.done [#allocation3], 256
    $region9: #{tpu_custom_call.1} parent=1 // pred_fallthru
      _
    %v21 = vld [vmem:[#allocation2] sm:$0xff]
    %v22 = vld [vmem:[#allocation2 + $0x8] sm:$0xff]
    %v23 = vand.u32 2147483647, %v21
    %v24 = vand.u32 2147483647, %v22
    %v25 = vsub.f32 0.0, %v23
    %v26 = vsub.f32 0.0, %v24
    %v27 = vmul.f32 %v25, 1.442695
    %v28 = vpow.pop %v27
    %v29 = vmul.f32 %v26, 1.442695
    %v30 = vpow.pop %v29
    %vm31 = vcmp.ge.f32.partialorder %v21, 0.0
    %vm32 = vcmp.ge.f32.partialorder %v22, 0.0
    %v33 = vmul.f32 %v28, %v28
    %v34 = vmul.f32 %v30, %v30
    %v35 = vmul.f32 %v28, 2.0
    %v36 = vmul.f32 %v30, 2.0
    %v37 = vadd.f32 %v35, 1.0
    %v38 = vadd.f32 %v36, 1.0
    %v39 = vadd.f32 %v28, 2.0
    %v40 = vadd.f32 %v30, 2.0
    %v41 = vmul.f32 %v28, %v39
    %v42 = vmul.f32 %v30, %v40
    %v43 = vsel %vm31, %v37, %v41
    %v44 = vsel %vm32, %v38, %v42
    %v45 = vmul.f32 %v33, 2.0
    %v46 = vmul.f32 %v34, 2.0
    %v47 = vsel %vm31, %v45, 2.0
    %v48 = vsel %vm32, %v46, 2.0
    %v49 = vadd.f32 %v43, %v47
    %v50 = vadd.f32 %v44, %v48
    %v51 = vrcp.pop %v49
    %v52 = vrcp.pop %v50
    %v53 = vmul.f32 %v49, %v51
    %v54 = vmul.f32 %v50, %v52
    %v55 = vsub.f32 2.0, %v53
    %v56 = vsub.f32 2.0, %v54
    %v57 = vmul.f32 %v51, %v55
    %v58 = vmul.f32 %v52, %v56
    %v59 = vmul.f32 %v49, %v57
    %v60 = vmul.f32 %v50, %v58
    %v61 = vsub.f32 2.0, %v59
    %v62 = vsub.f32 2.0, %v60
    %v63 = vmul.f32 %v57, %v61
    %v64 = vmul.f32 %v58, %v62
    %v65 = vmul.f32 %v21, %v43
    %v66 = vmul.f32 %v22, %v44
    %v67 = vmul.f32 %v65, %v63
    %v68 = vmul.f32 %v66, %v64
    %69 = vst [vmem:[#allocation5] sm:$0xff] %v67
    %70 = vst [vmem:[#allocation5 + $0x8] sm:$0xff] %v68
    // Predicated region
    $region10: #{tpu_custom_call.1} parent=1 // pred_check
      _
    $region11: #{tpu_custom_call.1} parent=1 // pred_check_branch
      %72 = sbr.rel (0) target = $region13
    $region12: #{tpu_custom_call.1} parent=1 // pred_region
      %s74 = ssub.s32 256, 256
      %75 = vsyncadd [#allocation4], %s74
      %s77 = sshll.u32 [#allocation5], 4
      %s78 = int_to_ptr.vmem [resolvable:$true] %s77
      %80 = dma.vmem_to_hbm [thread:$0]  %s78, 256, %s1, [#allocation4]
    $region13: #{tpu_custom_call.1} parent=1 // pred_fallthru
      _
    // Predicated region
    $region14: #{tpu_custom_call.1} parent=1 // pred_check
      _
    $region15: #{tpu_custom_call.1} parent=1 // pred_check_branch
      %82 = sbr.rel (0) target = $region17
    $region16: #{tpu_custom_call.1} parent=1 // pred_region
      %83 = dma.done [#allocation4], 256
    $region17: #{tpu_custom_call.1} parent=1 // pred_fallthru
      _
    %84 = vsyncpa [#allocation3], 1
    %85 = vsyncpa [#allocation4], 1

</llo_original>
